<compile_context>
chip_gen: v7x
topology: tpu7x:2x2x1
jax: 0.10.0
libtpu: 0.0.40
codegen_flags: <defaults>
</compile_context>

<pallas_src>
import functools

import jax
import jax.numpy as jnp
from jax.experimental import pallas as pl
from jax.experimental.pallas import tpu as pltpu

LANE = 128
MAX_BLOCK_ROWS = 2048  # 2048*128*4B = 1 MiB per f32 input block


def _bce_dice_partials_kernel(x_ref, g_ref, out_ref, *, n_valid, block_rows,
                              needs_mask):
    """Writes lane-wise partial sums [bce_terms, p*g, p, g] for this block."""
    x = x_ref[...].astype(jnp.float32)   # logits
    g = g_ref[...].astype(jnp.float32)   # targets

    # exp(-|x|) is shared by the stable BCE-with-logits term and the sigmoid.
    e = jnp.exp(-jnp.abs(x))
    bce = jnp.maximum(x, 0.0) - x * g + jnp.log1p(e)
    r = 1.0 / (1.0 + e)
    p = jnp.where(x >= 0.0, r, 1.0 - r)   # sigmoid(x), reusing e
    pg = p * g

    if needs_mask:
        # Only traced when the flat element count is not a multiple of the block
        # size: zero out the contributions of the zero-padded tail.
        i = pl.program_id(0)
        row = jax.lax.broadcasted_iota(jnp.int32, x.shape, 0)
        lane = jax.lax.broadcasted_iota(jnp.int32, x.shape, 1)
        gidx = (i * block_rows + row) * LANE + lane
        valid = gidx < n_valid
        zero = jnp.zeros_like(x)
        bce = jnp.where(valid, bce, zero)
        pg = jnp.where(valid, pg, zero)
        p = jnp.where(valid, p, zero)
        g = jnp.where(valid, g, zero)

    out_ref[0, 0, :] = jnp.sum(bce, axis=0)
    out_ref[0, 1, :] = jnp.sum(pg, axis=0)   # tp contributions
    out_ref[0, 2, :] = jnp.sum(p, axis=0)    # sum of predictions
    out_ref[0, 3, :] = jnp.sum(g, axis=0)    # sum of ground truth


@functools.partial(jax.jit, static_argnames=("eps", "beta"))
def bce_dice_loss(y_pr, y_gt, eps=1e-7, beta=2.0):
    """BCEDiceLoss.forward: BCEWithLogitsLoss(mean) + (1 - f_score(sigmoid(y_pr), y_gt)).

    threshold=None and ignore_channels=None (module defaults) -> single global reduction.
    """
    assert y_pr.shape == y_gt.shape
    n_elem = y_pr.size

    rows_needed = -(-n_elem // LANE)
    block_rows = min(MAX_BLOCK_ROWS, ((rows_needed + 7) // 8) * 8)
    num_blocks = -(-rows_needed // block_rows)
    padded_rows = num_blocks * block_rows
    pad = padded_rows * LANE - n_elem
    needs_mask = pad > 0

    xf = y_pr.reshape(-1)
    gf = y_gt.reshape(-1)
    if pad:
        # TODO(synk): for very large unaligned inputs, a bulk-kernel + tiny JAX tail
        # epilogue would avoid this full-array pad copy.
        xf = jnp.pad(xf, (0, pad))
        gf = jnp.pad(gf, (0, pad))
    x2 = xf.reshape(padded_rows, LANE)
    g2 = gf.reshape(padded_rows, LANE)

    in_blk = pl.BlockSpec((block_rows, LANE), lambda i: (i, 0))
    out_blk = pl.BlockSpec((1, 4, LANE), lambda i: (i, 0, 0))

    bytes_accessed = (x2.size * x2.dtype.itemsize
                      + g2.size * g2.dtype.itemsize
                      + num_blocks * 4 * LANE * 4)
    cost = pl.CostEstimate(flops=14 * n_elem,
                           transcendentals=2 * n_elem,
                           bytes_accessed=bytes_accessed)

    kernel = functools.partial(_bce_dice_partials_kernel,
                               n_valid=n_elem,
                               block_rows=block_rows,
                               needs_mask=needs_mask)

    partials = pl.pallas_call(
        kernel,
        out_shape=jax.ShapeDtypeStruct((num_blocks, 4, LANE), jnp.float32),
        grid=(num_blocks,),
        in_specs=[in_blk, in_blk],
        out_specs=out_blk,
        compiler_params=pltpu.CompilerParams(dimension_semantics=("parallel",)),
        cost_estimate=cost,
    )(x2, g2)

    sums = jnp.sum(partials, axis=(0, 2))            # (4,) f32
    bce_sum, tp, sum_p, sum_g = sums[0], sums[1], sums[2], sums[3]

    bce = bce_sum / n_elem                            # reduction='mean'
    fp = sum_p - tp
    fn = sum_g - tp
    b2 = beta * beta
    score = ((1.0 + b2) * tp + eps) / ((1.0 + b2) * tp + b2 * fn + fp + eps)
    return (1.0 - score) + bce


if __name__ == "__main__":
    key = jax.random.PRNGKey(0)
    k1, k2 = jax.random.split(key)
    # NCHW, like the PyTorch module's inputs.
    y_pr = jax.random.normal(k1, (2, 4, 16, 16), dtype=jnp.float32)            # logits
    y_gt = (jax.random.uniform(k2, (2, 4, 16, 16)) > 0.5).astype(jnp.float32)  # binary mask

    loss = bce_dice_loss(y_pr, y_gt)
    jax.block_until_ready(loss)

    # Pure-JAX reference check.
    x = y_pr.astype(jnp.float32)
    g = y_gt.astype(jnp.float32)
    bce_ref = jnp.mean(jnp.maximum(x, 0.0) - x * g + jnp.log1p(jnp.exp(-jnp.abs(x))))
    p = jax.nn.sigmoid(x)
    tp = jnp.sum(p * g)
    fp = jnp.sum(p) - tp
    fn = jnp.sum(g) - tp
    b2 = 4.0
    score = ((1.0 + b2) * tp + 1e-7) / ((1.0 + b2) * tp + b2 * fn + fp + 1e-7)
    ref = (1.0 - score) + bce_ref
    assert jnp.allclose(loss, ref, rtol=1e-5, atol=1e-5), (loss, ref)

    print("KERNEL_OK")
</pallas_src>

<mosaic_0001>
module attributes {stable_mosaic.version = 11 : i64} {
  func.func @_bce_dice_partials_kernel(%arg0: i32, %arg1: memref<16x128xf32, #tpu.memory_space<vmem>>, %arg2: memref<16x128xf32, #tpu.memory_space<vmem>>, %arg3: memref<1x4x128xf32, #tpu.memory_space<vmem>>) attributes {dimension_semantics = [#tpu.dimension_semantics<parallel>], iteration_bounds = array<i64: 1>, scalar_prefetch = 0 : i64, scratch_operands = 0 : i64, tpu.core_type = #tpu.core_type<tc>, window_params = [{transform_indices = @transform_0, window_bounds = array<i64: 16, 128>}, {transform_indices = @transform_1, window_bounds = array<i64: 16, 128>}, {transform_indices = @transform_2, window_bounds = array<i64: 1, 4, 128>}]} {
    %c0 = arith.constant 0 : index
    %c0_0 = arith.constant 0 : index
    %0 = vector.load %arg1[%c0, %c0_0] : memref<16x128xf32, #tpu.memory_space<vmem>>, vector<16x128xf32>
    %c0_1 = arith.constant 0 : index
    %c0_2 = arith.constant 0 : index
    %1 = vector.load %arg2[%c0_1, %c0_2] : memref<16x128xf32, #tpu.memory_space<vmem>>, vector<16x128xf32>
    %2 = math.absf %0 : vector<16x128xf32>
    %cst = arith.constant 0.000000e+00 : f32
    %3 = vector.broadcast %cst : f32 to vector<16x128xf32>
    %4 = arith.subf %3, %2 : vector<16x128xf32>
    %5 = math.exp %4 : vector<16x128xf32>
    %cst_3 = arith.constant 0.000000e+00 : f32
    %6 = vector.broadcast %cst_3 : f32 to vector<16x128xf32>
    %7 = arith.maximumf %0, %6 : vector<16x128xf32>
    %8 = arith.mulf %0, %1 : vector<16x128xf32>
    %9 = arith.subf %7, %8 : vector<16x128xf32>
    %10 = math.log1p %5 : vector<16x128xf32>
    %11 = arith.addf %9, %10 : vector<16x128xf32>
    %cst_4 = arith.constant 1.000000e+00 : f32
    %12 = vector.broadcast %cst_4 : f32 to vector<16x128xf32>
    %13 = arith.addf %12, %5 : vector<16x128xf32>
    %cst_5 = arith.constant 1.000000e+00 : f32
    %14 = vector.broadcast %cst_5 : f32 to vector<16x128xf32>
    %15 = arith.divf %14, %13 : vector<16x128xf32>
    %cst_6 = arith.constant 0.000000e+00 : f32
    %16 = vector.broadcast %cst_6 : f32 to vector<16x128xf32>
    %17 = arith.cmpf oge, %0, %16 : vector<16x128xf32>
    %cst_7 = arith.constant 1.000000e+00 : f32
    %18 = vector.broadcast %cst_7 : f32 to vector<16x128xf32>
    %19 = arith.subf %18, %15 : vector<16x128xf32>
    %20 = arith.select %17, %15, %19 : vector<16x128xi1>, vector<16x128xf32>
    %21 = arith.mulf %20, %1 : vector<16x128xf32>
    %cst_8 = arith.constant dense<0.000000e+00> : vector<128xf32>
    %22 = vector.multi_reduction <add>, %11, %cst_8 [0] : vector<16x128xf32> to vector<128xf32>
    %c0_9 = arith.constant 0 : index
    %c0_10 = arith.constant 0 : index
    %c0_11 = arith.constant 0 : index
    %23 = vector.load %arg3[%c0_9, %c0_10, %c0_11] : memref<1x4x128xf32, #tpu.memory_space<vmem>>, vector<1x1x128xf32>
    %24 = vector.shape_cast %23 : vector<1x1x128xf32> to vector<128xf32>
    %25 = vector.shape_cast %22 : vector<128xf32> to vector<1x1x128xf32>
    tpu.vector_store %arg3[%c0_9, %c0_10, %c0_11], %25 {strides = array<i32>} : memref<1x4x128xf32, #tpu.memory_space<vmem>>, vector<1x1x128xf32>,
    %cst_12 = arith.constant dense<0.000000e+00> : vector<128xf32>
    %26 = vector.multi_reduction <add>, %21, %cst_12 [0] : vector<16x128xf32> to vector<128xf32>
    %c0_13 = arith.constant 0 : index
    %c1 = arith.constant 1 : index
    %c0_14 = arith.constant 0 : index
    %27 = vector.load %arg3[%c0_13, %c1, %c0_14] : memref<1x4x128xf32, #tpu.memory_space<vmem>>, vector<1x1x128xf32>
    %28 = vector.shape_cast %27 : vector<1x1x128xf32> to vector<128xf32>
    %29 = vector.shape_cast %26 : vector<128xf32> to vector<1x1x128xf32>
    tpu.vector_store %arg3[%c0_13, %c1, %c0_14], %29 {strides = array<i32>} : memref<1x4x128xf32, #tpu.memory_space<vmem>>, vector<1x1x128xf32>,
    %cst_15 = arith.constant dense<0.000000e+00> : vector<128xf32>
    %30 = vector.multi_reduction <add>, %20, %cst_15 [0] : vector<16x128xf32> to vector<128xf32>
    %c0_16 = arith.constant 0 : index
    %c2 = arith.constant 2 : index
    %c0_17 = arith.constant 0 : index
    %31 = vector.load %arg3[%c0_16, %c2, %c0_17] : memref<1x4x128xf32, #tpu.memory_space<vmem>>, vector<1x1x128xf32>
    %32 = vector.shape_cast %31 : vector<1x1x128xf32> to vector<128xf32>
    %33 = vector.shape_cast %30 : vector<128xf32> to vector<1x1x128xf32>
    tpu.vector_store %arg3[%c0_16, %c2, %c0_17], %33 {strides = array<i32>} : memref<1x4x128xf32, #tpu.memory_space<vmem>>, vector<1x1x128xf32>,
    %cst_18 = arith.constant dense<0.000000e+00> : vector<128xf32>
    %34 = vector.multi_reduction <add>, %1, %cst_18 [0] : vector<16x128xf32> to vector<128xf32>
    %c0_19 = arith.constant 0 : index
    %c3 = arith.constant 3 : index
    %c0_20 = arith.constant 0 : index
    %35 = vector.load %arg3[%c0_19, %c3, %c0_20] : memref<1x4x128xf32, #tpu.memory_space<vmem>>, vector<1x1x128xf32>
    %36 = vector.shape_cast %35 : vector<1x1x128xf32> to vector<128xf32>
    %37 = vector.shape_cast %34 : vector<128xf32> to vector<1x1x128xf32>
    tpu.vector_store %arg3[%c0_19, %c3, %c0_20], %37 {strides = array<i32>} : memref<1x4x128xf32, #tpu.memory_space<vmem>>, vector<1x1x128xf32>,
    return
  }
  func.func @transform_0(%arg0: i32) -> (i32, i32) {
    %c0_i32 = arith.constant 0 : i32
    %c0_i32_0 = arith.constant 0 : i32
    return %arg0, %c0_i32 : i32, i32
  }
  func.func @transform_1(%arg0: i32) -> (i32, i32) {
    %c0_i32 = arith.constant 0 : i32
    %c0_i32_0 = arith.constant 0 : i32
    return %arg0, %c0_i32 : i32, i32
  }
  func.func @transform_2(%arg0: i32) -> (i32, i32, i32) {
    %c0_i32 = arith.constant 0 : i32
    %c0_i32_0 = arith.constant 0 : i32
    %c0_i32_1 = arith.constant 0 : i32
    return %arg0, %c0_i32, %c0_i32_0 : i32, i32, i32
  }
}

</mosaic_0001>

<llo_original>
// kernel: bce_dice_loss.1
$region0: #{bce_dice_loss.1}
  #allocation0 [shape = 'u32[]', space=smem, size = 0x4, offset = 0x4, fixed_abs, tag = 'smem constant byte address 0x4 - core index']
  #allocation1 [shape = 'u32[144,128]{1,0:T(1,128)}', space=vmem, size = 0x12000, scoped, tag = 'internal scratch']
  %s0 = inlined_call_operand.vmem [shape: f32[16,128], index: 0, kind: input, shape index: {}]
  %s1 = inlined_call_operand.vmem [shape: f32[16,128], index: 1, kind: input, shape index: {}]
  %s2 = inlined_call_operand.vmem [shape: f32[1,4,128], index: 2, kind: output, shape index: {}]
  %s3 = sld [smem:[#allocation0]]
  $region18: #{bce_dice_loss.1} parent=0
    _
  %s5 = ssub.s32 1, %s3
  %s6 = scalar_select 0, %s5, %s3
  // Predicated region
  $region2: #{bce_dice_loss.1} parent=0 // pred_check
    _
  $region3: #{bce_dice_loss.1} parent=0 // pred_check_branch
    %8 = sbr.rel (0) target = $region5
  $region4: #{bce_dice_loss.1} parent=0 // pred_region
    _
  $region5: #{bce_dice_loss.1} parent=0 // pred_fallthru
    _
  // Predicated region
  $region6: #{bce_dice_loss.1} parent=0 // pred_check
    _
  $region7: #{bce_dice_loss.1} parent=0 // pred_check_branch
    %10 = sbr.rel (0) target = $region9
  $region8: #{bce_dice_loss.1} parent=0 // pred_region
    _
  $region9: #{bce_dice_loss.1} parent=0 // pred_fallthru
    _
  %v11 = vld [vmem:[%s0] sm:$0xff]
  %v12 = vld [vmem:[%s0 + $0x8] sm:$0xff]
  %v13 = vld [vmem:[%s1] sm:$0xff]
  %v14 = vld [vmem:[%s1 + $0x8] sm:$0xff]
  %v15 = vand.u32 2147483647, %v11
  %v16 = vand.u32 2147483647, %v12
  %v17 = vsub.f32 0.0, %v15
  %v18 = vsub.f32 0.0, %v16
  %v19 = vmul.f32 %v17, 1.442695
  %v20 = vpow.pop %v19
  %v21 = vmul.f32 %v18, 1.442695
  %v22 = vpow.pop %v21
  %v23 = vmax.f32 %v11, 0.0
  %v24 = vmax.f32 %v12, 0.0
  %v25 = vmul.f32 %v11, %v13
  %v26 = vmul.f32 %v12, %v14
  %v27 = vsub.f32 %v23, %v25
  %v28 = vsub.f32 %v24, %v26
  %v29 = vadd.f32 %v20, 1.0
  %v30 = vlog2.pop %v29
  %v31 = vmul.f32 %v30, 0.6931472
  %v32 = vmul.f32 -0.5, %v20
  %v33 = vadd.f32 %v32, 1.0
  %v34 = vmul.f32 %v33, %v20
  %v35 = vand.u32 2147483647, %v20
  %vm36 = vcmp.lt.f32.partialorder %v35, 0.0004427343
  %v37 = vsel %vm36, %v34, %v31
  %v38 = vadd.f32 %v22, 1.0
  %v39 = vlog2.pop %v38
  %v40 = vmul.f32 %v39, 0.6931472
  %v41 = vmul.f32 -0.5, %v22
  %v42 = vadd.f32 %v41, 1.0
  %v43 = vmul.f32 %v42, %v22
  %v44 = vand.u32 2147483647, %v22
  %vm45 = vcmp.lt.f32.partialorder %v44, 0.0004427343
  %v46 = vsel %vm45, %v43, %v40
  %v47 = vadd.f32 %v27, %v37
  %v48 = vadd.f32 %v28, %v46
  %v49 = vadd.f32 %v20, 1.0
  %v50 = vadd.f32 %v22, 1.0
  %v51 = vrcp.pop %v49
  %v52 = vmul.f32 1.0, %v51
  %v53 = vrcp.pop %v50
  %v54 = vmul.f32 1.0, %v53
  %vm55 = vcmp.ge.f32.partialorder %v11, 0.0
  %vm56 = vcmp.ge.f32.partialorder %v12, 0.0
  %v57 = vsub.f32 1.0, %v52
  %v58 = vsub.f32 1.0, %v54
  %v59 = vsel %vm55, %v52, %v57
  %v60 = vsel %vm56, %v54, %v58
  %v61 = vmul.f32 %v59, %v13
  %v62 = vmul.f32 %v60, %v14
  %v63 = vadd.f32 %v47, %v48
  %v64 = vrot.slane %v63, 4
  %v65 = vadd.f32 %v63, %v64
  %v66 = vrot.slane %v65, 2
  %v67 = vadd.f32 %v65, %v66
  %v68 = vrot.slane %v67, 1
  %v69 = vadd.f32 %v67, %v68
  %70 = vst [vmem:[%s2] sm:$0x1] %v69
  %v71 = vadd.f32 %v61, %v62
  %v72 = vrot.slane %v71, 4
  %v73 = vadd.f32 %v71, %v72
  %v74 = vrot.slane %v73, 2
  %v75 = vadd.f32 %v73, %v74
  %v76 = vrot.slane %v75, 1
  %v77 = vadd.f32 %v75, %v76
  %78 = vst [vmem:[%s2 + $0x1] sm:$0x1] %v77
  %v79 = vadd.f32 %v59, %v60
  %v80 = vrot.slane %v79, 4
  %v81 = vadd.f32 %v79, %v80
  %v82 = vrot.slane %v81, 2
  %v83 = vadd.f32 %v81, %v82
  %v84 = vrot.slane %v83, 1
  %v85 = vadd.f32 %v83, %v84
  %86 = vst [vmem:[%s2 + $0x2] sm:$0x1] %v85
  %v87 = vadd.f32 %v13, %v14
  %v88 = vrot.slane %v87, 4
  %v89 = vadd.f32 %v87, %v88
  %v90 = vrot.slane %v89, 2
  %v91 = vadd.f32 %v89, %v90
  %v92 = vrot.slane %v91, 1
  %v93 = vadd.f32 %v91, %v92
  %94 = vst [vmem:[%s2 + $0x3] sm:$0x1] %v93
  // Predicated region
  $region10: #{bce_dice_loss.1} parent=0 // pred_check
    _
  $region11: #{bce_dice_loss.1} parent=0 // pred_check_branch
    %96 = sbr.rel (0) target = $region13
  $region12: #{bce_dice_loss.1} parent=0 // pred_region
    _
  $region13: #{bce_dice_loss.1} parent=0 // pred_fallthru
    _
  // Predicated region
  $region14: #{bce_dice_loss.1} parent=0 // pred_check
    _
  $region15: #{bce_dice_loss.1} parent=0 // pred_check_branch
    %98 = sbr.rel (0) target = $region17
  $region16: #{bce_dice_loss.1} parent=0 // pred_region
    _
  $region17: #{bce_dice_loss.1} parent=0 // pred_fallthru
    _

</llo_original>
